<compile_context>
chip_gen: v7x
topology: tpu7x:2x2x1
jax: 0.10.0
libtpu: 0.0.40
codegen_flags: <defaults>
</compile_context>

<pallas_src>
import functools

import jax
import jax.numpy as jnp
from jax import lax
from jax.experimental import pallas as pl
from jax.experimental.pallas import tpu as pltpu

XENT = 0.1       # module default
EPS = 1e-12      # F.normalize eps (clamp on the norm)


def cosine_loss_kernel(x_ref, t_ref, o_ref, acc_ref, cols_ref, *,
                       n_rows, tile_n, tiles_per_shard, first_masked_tile,
                       xent, needs_mask):
    c = pl.program_id(0)   # shard (parallel axis -> one TensorCore each on v7x)
    i = pl.program_id(1)   # row tile within the shard (serial reduction axis)

    @pl.when(i == 0)
    def _init():
        acc_ref[...] = jnp.zeros_like(acc_ref)
        # Cache the class-index iota once per shard: each step then does a vector
        # load (ld slots have slack) instead of a broadcasted_iota VALU op.
        cols_ref[...] = lax.broadcasted_iota(jnp.int32, cols_ref.shape, 1)

    x = x_ref[...].astype(jnp.float32)    # (tn, C); native dtype streamed, cast in-register
    t = t_ref[...]                        # (tn, 1) int32
    tn, _ = x.shape

    # --- L2 normalize rows: x * rsqrt(max(sumsq, eps^2))  (rsqrt -> EUP, not VALU div)
    sumsq = jnp.sum(x * x, axis=1, keepdims=True)
    inv_norm = lax.rsqrt(jnp.maximum(sumsq, EPS * EPS))
    z = x * inv_norm                      # |z| <= 1 per element

    # --- gather z[i, t_i] via cached-iota compare + lane reduce (select, NOT a
    #     multiply-by-mask: this also squashes NaN/Inf from padded tail reads)
    picked = jnp.sum(jnp.where(cols_ref[...] == t, z, 0.0), axis=1, keepdims=True)

    # --- logsumexp WITHOUT max-shift: safe only because z is L2-normalized (|z|<=1)
    lse = jnp.log(jnp.sum(jnp.exp(z), axis=1, keepdims=True))

    # per-row contribution: xent*lse - (1+xent)*picked
    row_terms = xent * lse - (1.0 + xent) * picked          # (tn, 1)

    if needs_mask:
        g = c * tiles_per_shard + i        # un-clamped global tile index
        is_edge = g >= first_masked_tile   # partial last tile or clamped overrun tile

        @pl.when(is_edge)
        def _acc_masked():
            rows = g * tile_n + lax.broadcasted_iota(jnp.int32, (tn, 1), 0)
            kept = jnp.where(rows < n_rows, row_terms, 0.0)
            acc_ref[...] = acc_ref[...] + jnp.sum(kept, axis=0, keepdims=True)

        @pl.when(jnp.logical_not(is_edge))
        def _acc_full():
            acc_ref[...] = acc_ref[...] + jnp.sum(row_terms, axis=0, keepdims=True)
    else:
        acc_ref[...] = acc_ref[...] + jnp.sum(row_terms, axis=0, keepdims=True)

    @pl.when(i == pl.num_programs(1) - 1)
    def _finalize():
        # Per-shard partial sum, written as a lane-dense (8,128) block; the final
        # (1 + sum/N) is done in the wrapper.
        o_ref[...] = jnp.broadcast_to(acc_ref[...], o_ref.shape).astype(jnp.float32)


def _vmem_limit_bytes():
    # Generation-aware cap: ~3/4 of the queried per-core VMEM, never above 96 MiB.
    # v5e/v6e (128 MiB physical) -> 96 MiB; v7x (64 MiB per TC) -> 48 MiB.
    try:
        cap = int(pltpu.get_tpu_info().vmem_capacity_bytes)
    except Exception:
        cap = 64 * 1024 * 1024            # conservative fallback (v7x-sized)
    return min(96 * 1024 * 1024, (cap * 3) // 4)


def _choose_tile_n(n_cols, itemsize, vmem_limit_bytes):
    # Streamed HBM bytes per row (native dtype of x):
    stream_per_row = n_cols * itemsize
    # Resident VMEM bytes per row of one tile:
    #   2x double-buffered native x block, ~5 live f32 (tile, C) temporaries
    #   (cast copy, x*x, z, exp(z), select result), the cached int32 column iota,
    #   plus a fixed lane-padding tax for every (tile, 1)-shaped buffer (targets
    #   block x2 + ~4 live per-row temporaries), each of which costs a 128-lane
    #   vreg row (512 B) per 8 data rows regardless of C.
    resident_per_row = 2 * stream_per_row + n_cols * (5 * 4 + 4) + 6 * 512
    # Target ~4 MiB of streamed input per tile (>=85% of HBM roofline in measured
    # tile sweeps) while keeping the resident footprint within ~half the scoped
    # VMEM limit (rest is headroom for spills / pipeline bookkeeping).
    budget_total = max(vmem_limit_bytes // 2, 2 * 1024 * 1024)
    tile = min((4 * 1024 * 1024) // max(stream_per_row, 1),
               budget_total // max(resident_per_row, 1))
    return max(8, min(32768, (tile // 8) * 8))


def cosine_loss_forward(x, target, *, xent=XENT, max_tile_n=None, num_shards=2):
    """x: (N, C) float (any real dtype), target: (N,) int class indices in [0, C)."""
    n, c = x.shape
    t = target.astype(jnp.int32).reshape(n, 1)

    vmem_limit = _vmem_limit_bytes()
    tile_n = _choose_tile_n(c, jnp.dtype(x.dtype).itemsize, vmem_limit)
    if max_tile_n is not None:
        tile_n = min(tile_n, max(8, (max_tile_n // 8) * 8))
    if n <= tile_n:
        tile_n = n                          # single full-extent block

    num_tiles = -(-n // tile_n)
    # Size-2 parallel axis: shards row tiles across both TensorCores on v7x; on
    # 1-TC chips it is just one extra (cheap) outer grid step.
    num_shards = max(1, min(num_shards, num_tiles))
    tiles_per_shard = -(-num_tiles // num_shards)

    partial_tail = (n % tile_n) != 0
    overrun = num_shards * tiles_per_shard != num_tiles
    needs_mask = partial_tail or overrun              # skipped statically when exact
    first_masked_tile = (n // tile_n) if partial_tail else num_tiles

    def row_block(cs, it):
        # Clamp overrun tiles of the last shard to a valid block; their rows are
        # masked to zero inside the kernel.
        return (jnp.minimum(cs * tiles_per_shard + it, num_tiles - 1), 0)

    kernel = functools.partial(
        cosine_loss_kernel,
        n_rows=n, tile_n=tile_n, tiles_per_shard=tiles_per_shard,
        first_masked_tile=first_masked_tile, xent=float(xent),
        needs_mask=needs_mask)

    out = pl.pallas_call(
        kernel,
        out_shape=jax.ShapeDtypeStruct((num_shards, 8, 128), jnp.float32),
        grid=(num_shards, tiles_per_shard),
        in_specs=[
            # If profiling ever shows the prologue DMA exposed at these large
            # tiles, bump to pipeline_mode=pl.Buffered(3); default 2-deep otherwise.
            pl.BlockSpec((tile_n, c), row_block),
            pl.BlockSpec((tile_n, 1), row_block),
        ],
        out_specs=pl.BlockSpec((1, 8, 128), lambda cs, it: (cs, 0, 0)),
        scratch_shapes=[
            pltpu.VMEM((1, 1), jnp.float32),       # per-shard running sum
            pltpu.VMEM((tile_n, c), jnp.int32),    # cached column (class) iota
        ],
        compiler_params=pltpu.CompilerParams(
            dimension_semantics=("parallel", "arbitrary"),
            vmem_limit_bytes=vmem_limit,
        ),
    )(x, t)

    # Each shard's partial lives at [s, 0, 0]; finish mean + constant here (2 floats).
    return 1.0 + jnp.sum(out[:, 0, 0]) / n


def cosine_loss_reference(x, target, *, xent=XENT):
    """Pure-JAX reference mirroring the PyTorch forward."""
    x = x.astype(jnp.float32)
    n, _ = x.shape
    norm = jnp.sqrt(jnp.sum(x * x, axis=1, keepdims=True))
    z = x / jnp.maximum(norm, EPS)
    picked = jnp.take_along_axis(z, target.reshape(n, 1).astype(jnp.int32), axis=1)[:, 0]
    cos_loss = jnp.mean(1.0 - picked)
    lse = jax.scipy.special.logsumexp(z, axis=1)
    ce_loss = jnp.mean(lse - picked)
    return cos_loss + xent * ce_loss


if __name__ == "__main__":
    key = jax.random.PRNGKey(0)
    k1, k2, k3, k4, k5, k6 = jax.random.split(key, 6)

    # 1) small single-tile path (single shard, no masking)
    N, C = 8, 32
    x = jax.random.normal(k1, (N, C), dtype=jnp.float32)
    t = jax.random.randint(k2, (N,), 0, C, dtype=jnp.int32)
    out = jax.block_until_ready(cosine_loss_forward(x, t))
    ref = cosine_loss_reference(x, t)
    assert jnp.allclose(out, ref, atol=1e-5, rtol=1e-5), (out, ref)

    # 2) multi-tile, two shards, partial (masked) last tile: 100 = 3*32 + 4
    N2, C2 = 100, 64
    x2 = jax.random.normal(k3, (N2, C2), dtype=jnp.float32)
    t2 = jax.random.randint(k4, (N2,), 0, C2, dtype=jnp.int32)
    out2 = jax.block_until_ready(cosine_loss_forward(x2, t2, max_tile_n=32))
    ref2 = cosine_loss_reference(x2, t2)
    assert jnp.allclose(out2, ref2, atol=1e-5, rtol=1e-5), (out2, ref2)

    # 3) odd tile count -> second shard gets a clamped, fully-masked overrun tile;
    #    also exercises the bf16 streaming + in-kernel f32 cast path
    N3, C3 = 96, 48
    x3 = jax.random.normal(k5, (N3, C3), dtype=jnp.float32).astype(jnp.bfloat16)
    t3 = jax.random.randint(k6, (N3,), 0, C3, dtype=jnp.int32)
    out3 = jax.block_until_ready(cosine_loss_forward(x3, t3, max_tile_n=32))
    ref3 = cosine_loss_reference(x3, t3)
    assert jnp.allclose(out3, ref3, atol=1e-4, rtol=1e-4), (out3, ref3)

    print("KERNEL_OK")
</pallas_src>

<mosaic_0001>
module attributes {stable_mosaic.version = 11 : i64} {
  func.func @cosine_loss_kernel(%arg0: i32, %arg1: i32, %arg2: memref<8x32xf32, #tpu.memory_space<vmem>>, %arg3: memref<8x1xi32, #tpu.memory_space<vmem>>, %arg4: memref<1x8x128xf32, #tpu.memory_space<vmem>>, %arg5: memref<1x1xf32, #tpu.memory_space<vmem>>, %arg6: memref<8x32xi32, #tpu.memory_space<vmem>>) attributes {dimension_semantics = [#tpu.dimension_semantics<parallel>, #tpu.dimension_semantics<arbitrary>], iteration_bounds = array<i64: 1, 1>, scalar_prefetch = 0 : i64, scratch_operands = 2 : i64, tpu.core_type = #tpu.core_type<tc>, window_params = [{transform_indices = @transform_0, window_bounds = array<i64: 8, 32>}, {transform_indices = @transform_1, window_bounds = array<i64: 8, 1>}, {transform_indices = @transform_2, window_bounds = array<i64: 1, 8, 128>}]} {
    %c0_i32 = arith.constant 0 : i32
    %0 = arith.cmpi eq, %arg1, %c0_i32 : i32
    %1 = arith.extui %0 : i1 to i32
    %c0_i32_0 = arith.constant 0 : i32
    %2 = arith.cmpi ne, %1, %c0_i32_0 : i32
    scf.if %2 {
      %cst_19 = arith.constant 0.000000e+00 : f32
      %37 = vector.broadcast %cst_19 : f32 to vector<1x1xf32>
      %c0_20 = arith.constant 0 : index
      %c0_21 = arith.constant 0 : index
      %38 = vector.load %arg5[%c0_20, %c0_21] : memref<1x1xf32, #tpu.memory_space<vmem>>, vector<1x1xf32>
      tpu.vector_store %arg5[%c0_20, %c0_21], %37 {strides = array<i32>} : memref<1x1xf32, #tpu.memory_space<vmem>>, vector<1x1xf32>,
      %39 = tpu.iota {dimensions = array<i32: 1>} : vector<8x32xi32>
      %c0_22 = arith.constant 0 : index
      %c0_23 = arith.constant 0 : index
      %40 = vector.load %arg6[%c0_22, %c0_23] : memref<8x32xi32, #tpu.memory_space<vmem>>, vector<8x32xi32>
      tpu.vector_store %arg6[%c0_22, %c0_23], %39 {strides = array<i32>} : memref<8x32xi32, #tpu.memory_space<vmem>>, vector<8x32xi32>,
    } else {
    }
    %c0 = arith.constant 0 : index
    %c0_1 = arith.constant 0 : index
    %3 = vector.load %arg2[%c0, %c0_1] : memref<8x32xf32, #tpu.memory_space<vmem>>, vector<8x32xf32>
    %c0_2 = arith.constant 0 : index
    %c0_3 = arith.constant 0 : index
    %4 = vector.load %arg3[%c0_2, %c0_3] : memref<8x1xi32, #tpu.memory_space<vmem>>, vector<8x1xi32>
    %5 = arith.mulf %3, %3 : vector<8x32xf32>
    %cst = arith.constant dense<0.000000e+00> : vector<8xf32>
    %6 = vector.multi_reduction <add>, %5, %cst [1] : vector<8x32xf32> to vector<8xf32>
    %7 = vector.shape_cast %6 : vector<8xf32> to vector<8x1xf32>
    %cst_4 = arith.constant 1.000000e-24 : f32
    %8 = vector.broadcast %cst_4 : f32 to vector<8x1xf32>
    %9 = arith.maximumf %7, %8 : vector<8x1xf32>
    %10 = math.rsqrt %9 : vector<8x1xf32>
    %11 = vector.broadcast %10 : vector<8x1xf32> to vector<8x32xf32>
    %12 = arith.mulf %3, %11 : vector<8x32xf32>
    %c0_5 = arith.constant 0 : index
    %c0_6 = arith.constant 0 : index
    %13 = vector.load %arg6[%c0_5, %c0_6] : memref<8x32xi32, #tpu.memory_space<vmem>>, vector<8x32xi32>
    %14 = vector.broadcast %4 : vector<8x1xi32> to vector<8x32xi32>
    %15 = arith.cmpi eq, %13, %14 : vector<8x32xi32>
    %cst_7 = arith.constant 0.000000e+00 : f32
    %16 = vector.broadcast %cst_7 : f32 to vector<8x32xf32>
    %17 = arith.select %15, %12, %16 : vector<8x32xi1>, vector<8x32xf32>
    %cst_8 = arith.constant dense<0.000000e+00> : vector<8xf32>
    %18 = vector.multi_reduction <add>, %17, %cst_8 [1] : vector<8x32xf32> to vector<8xf32>
    %19 = vector.shape_cast %18 : vector<8xf32> to vector<8x1xf32>
    %20 = math.exp %12 : vector<8x32xf32>
    %cst_9 = arith.constant dense<0.000000e+00> : vector<8xf32>
    %21 = vector.multi_reduction <add>, %20, %cst_9 [1] : vector<8x32xf32> to vector<8xf32>
    %22 = vector.shape_cast %21 : vector<8xf32> to vector<8x1xf32>
    %23 = math.log %22 : vector<8x1xf32>
    %cst_10 = arith.constant 1.000000e-01 : f32
    %24 = vector.broadcast %cst_10 : f32 to vector<8x1xf32>
    %25 = arith.mulf %24, %23 : vector<8x1xf32>
    %cst_11 = arith.constant 1.100000e+00 : f32
    %26 = vector.broadcast %cst_11 : f32 to vector<8x1xf32>
    %27 = arith.mulf %26, %19 : vector<8x1xf32>
    %28 = arith.subf %25, %27 : vector<8x1xf32>
    %c0_12 = arith.constant 0 : index
    %c0_13 = arith.constant 0 : index
    %29 = vector.load %arg5[%c0_12, %c0_13] : memref<1x1xf32, #tpu.memory_space<vmem>>, vector<1x1xf32>
    %cst_14 = arith.constant dense<0.000000e+00> : vector<1xf32>
    %30 = vector.multi_reduction <add>, %28, %cst_14 [0] : vector<8x1xf32> to vector<1xf32>
    %31 = vector.shape_cast %30 : vector<1xf32> to vector<1x1xf32>
    %32 = arith.addf %29, %31 : vector<1x1xf32>
    %c0_15 = arith.constant 0 : index
    %c0_16 = arith.constant 0 : index
    %33 = vector.load %arg5[%c0_15, %c0_16] : memref<1x1xf32, #tpu.memory_space<vmem>>, vector<1x1xf32>
    tpu.vector_store %arg5[%c0_15, %c0_16], %32 {strides = array<i32>} : memref<1x1xf32, #tpu.memory_space<vmem>>, vector<1x1xf32>,
    %c0_i32_17 = arith.constant 0 : i32
    %34 = arith.cmpi eq, %arg1, %c0_i32_17 : i32
    %35 = arith.extui %34 : i1 to i32
    %c0_i32_18 = arith.constant 0 : i32
    %36 = arith.cmpi ne, %35, %c0_i32_18 : i32
    scf.if %36 {
      %c0_19 = arith.constant 0 : index
      %c0_20 = arith.constant 0 : index
      %37 = vector.load %arg5[%c0_19, %c0_20] : memref<1x1xf32, #tpu.memory_space<vmem>>, vector<1x1xf32>
      %38 = vector.shape_cast %37 : vector<1x1xf32> to vector<1x1x1xf32>
      %39 = vector.broadcast %38 : vector<1x1x1xf32> to vector<1x8x128xf32>
      %c0_21 = arith.constant 0 : index
      %c0_22 = arith.constant 0 : index
      %c0_23 = arith.constant 0 : index
      %40 = vector.load %arg4[%c0_21, %c0_22, %c0_23] : memref<1x8x128xf32, #tpu.memory_space<vmem>>, vector<1x8x128xf32>
      tpu.vector_store %arg4[%c0_21, %c0_22, %c0_23], %39 {strides = array<i32>} : memref<1x8x128xf32, #tpu.memory_space<vmem>>, vector<1x8x128xf32>,
    } else {
    }
    return
  }
  func.func @transform_0(%arg0: i32, %arg1: i32) -> (i32, i32) {
    %c1_i32 = arith.constant 1 : i32
    %0 = arith.muli %arg0, %c1_i32 : i32
    %1 = arith.addi %0, %arg1 : i32
    %c0_i32 = arith.constant 0 : i32
    %2 = arith.minsi %1, %c0_i32 : i32
    %c0_i32_0 = arith.constant 0 : i32
    %c0_i32_1 = arith.constant 0 : i32
    return %2, %c0_i32_0 : i32, i32
  }
  func.func @transform_1(%arg0: i32, %arg1: i32) -> (i32, i32) {
    %c1_i32 = arith.constant 1 : i32
    %0 = arith.muli %arg0, %c1_i32 : i32
    %1 = arith.addi %0, %arg1 : i32
    %c0_i32 = arith.constant 0 : i32
    %2 = arith.minsi %1, %c0_i32 : i32
    %c0_i32_0 = arith.constant 0 : i32
    %c0_i32_1 = arith.constant 0 : i32
    return %2, %c0_i32_0 : i32, i32
  }
  func.func @transform_2(%arg0: i32, %arg1: i32) -> (i32, i32, i32) {
    %c0_i32 = arith.constant 0 : i32
    %c0_i32_0 = arith.constant 0 : i32
    %c0_i32_1 = arith.constant 0 : i32
    return %arg0, %c0_i32, %c0_i32_0 : i32, i32, i32
  }
}

</mosaic_0001>

<llo_original>
// kernel: tpu_custom_call.1
$region0: #{tpu_custom_call.1}
  #allocation0 [shape = 'u32[]', space=smem, size = 0x4, offset = 0x4, fixed_abs, tag = 'smem constant byte address 0x4 - core index']
  #allocation1 [shape = 'u32[144,128]{1,0:T(1,128)}', space=vmem, size = 0x12000, scoped, tag = 'internal scratch']
  #allocation2 [shape = 'f32[1,1]{1,0:T(1,128)}', space=vmem, size = 0x200, scoped, tag = 'scratch operand']
  #allocation3 [shape = 's32[8,32]{1,0:T(8,128)}', space=vmem, size = 0x1000, scoped, tag = 'scratch operand']
  %s0 = inlined_call_operand.vmem [shape: f32[8,32], index: 0, kind: input, shape index: {}]
  %s1 = inlined_call_operand.vmem [shape: s32[8,1], index: 1, kind: input, shape index: {}]
  %s2 = inlined_call_operand.hbm [shape: f32[1,8,128], index: 2, kind: output, shape index: {}]
  %s3 = sld [smem:[#allocation0]]
  $region26: #{tpu_custom_call.1} parent=0
    _
  %s5 = ssub.s32 1, %s3
  %s6 = scalar_select 0, %s5, %s3
  $region1: #{tpu_custom_call.1} parent=0
    #allocation4 [shape = 'u8[4096]{0}', space=vmem, size = 0x1000, scoped, tag = 'output window, operand 0, single buffered']
    #allocation5 [shape = 's32[1]{0}', space=sflag, size = 0x4, scoped, tag = 'scoped memory for tpu_custom_call.1']
    %7 = vsyncpa [#allocation5], 0
    // Predicated region
    $region2: #{tpu_custom_call.1} parent=1 // pred_check
      _
    $region3: #{tpu_custom_call.1} parent=1 // pred_check_branch
      %9 = sbr.rel (0) target = $region5
    $region4: #{tpu_custom_call.1} parent=1 // pred_region
      %s10 = sadd.s32 0, 0
      %p11 = scmp.lt.s32.totalorder %s10, 0
      %s12 = scalar_select %p11, %s10, 0
      %p13 = scmp.lt.s32.totalorder %s12, 0
      %s14 = scalar_select %p13, %s12, 0
      %s15 = smul.addr %s14, 8
      %s16 = scalar_lea.vmem %s0, %s15
      %s17 = sadd.s32 0, 0
      %p18 = scmp.lt.s32.totalorder %s17, 0
      %s19 = scalar_select %p18, %s17, 0
    $region5: #{tpu_custom_call.1} parent=1 // pred_fallthru
      _
    // Predicated region
    $region6: #{tpu_custom_call.1} parent=1 // pred_check
      _
    $region7: #{tpu_custom_call.1} parent=1 // pred_check_branch
      %21 = sbr.rel (0) target = $region9
    $region8: #{tpu_custom_call.1} parent=1 // pred_region
      %s22 = sadd.s32 0, 0
      %p23 = scmp.lt.s32.totalorder %s22, 0
      %s24 = scalar_select %p23, %s22, 0
      %p25 = scmp.lt.s32.totalorder %s24, 0
      %s26 = scalar_select %p25, %s24, 0
      %s27 = smul.addr %s26, 8
      %s28 = scalar_lea.vmem %s1, %s27
      %s29 = sadd.s32 0, 0
      %p30 = scmp.lt.s32.totalorder %s29, 0
      %s31 = scalar_select %p30, %s29, 0
    $region9: #{tpu_custom_call.1} parent=1 // pred_fallthru
      _
    %s32 = sadd.s32 0, 0
    %p33 = scmp.lt.s32.totalorder %s32, 0
    %s34 = scalar_select %p33, %s32, 0
    %p35 = scmp.lt.s32.totalorder %s34, 0
    %s36 = scalar_select %p35, %s34, 0
    %s37 = smul.addr %s36, 8
    %s38 = scalar_lea.vmem %s0, %s37
    %s39 = sadd.s32 0, 0
    %p40 = scmp.lt.s32.totalorder %s39, 0
    %s41 = scalar_select %p40, %s39, 0
    %p42 = scmp.lt.s32.totalorder %s41, 0
    %s43 = scalar_select %p42, %s41, 0
    %s44 = smul.addr %s43, 8
    %s45 = scalar_lea.vmem %s1, %s44
    %s46 = sadd.s32 0, 0
    %p47 = scmp.lt.s32.totalorder %s46, 0
    %s48 = scalar_select %p47, %s46, 0
    %p49 = scmp.lt.s32.totalorder %s48, 0
    %s50 = scalar_select %p49, %s48, 0
    %s51 = smul.addr %s50, 8
    %s52 = scalar_lea.vmem %s0, %s51
    %s53 = sadd.s32 0, 0
    %p54 = scmp.lt.s32.totalorder %s53, 0
    %s55 = scalar_select %p54, %s53, 0
    %s56 = sadd.s32 0, 0
    %p57 = scmp.lt.s32.totalorder %s56, 0
    %s58 = scalar_select %p57, %s56, 0
    %p59 = scmp.lt.s32.totalorder %s58, 0
    %s60 = scalar_select %p59, %s58, 0
    %s61 = smul.addr %s60, 8
    %s62 = scalar_lea.vmem %s1, %s61
    %s63 = sadd.s32 0, 0
    %p64 = scmp.lt.s32.totalorder %s63, 0
    %s65 = scalar_select %p64, %s63, 0
    %p66 = scmp.eq.s32.totalorder 0, 0
    // Predicated region
    $region10: #{tpu_custom_call.1} parent=1 // pred_check
      %p67 = pneg %p66
    $region11: #{tpu_custom_call.1} parent=1 // pred_check_branch
      %69 = sbr.rel (%p67) target = $region13
    $region12: #{tpu_custom_call.1} parent=1 // pred_region
      %vm70 = vcmask 0
      %71 = vst.msk [vmem:[#allocation2] sm:$0x1] %vm70, 0.0
      %v72 = vlaneseq
      %v73 = vand.u32 %v72, 127
      %vm74 = vcmask 261120
      %75 = vst.msk [vmem:[#allocation3] sm:$0xff] %vm74, %v73
    $region13: #{tpu_custom_call.1} parent=1 // pred_fallthru
      _
    %v76 = vld [vmem:[%s52] sm:$0xff]
    %v77 = vld [vmem:[%s62] sm:$0xff]
    %v78 = vmul.f32 %v76, %v76
    %vm79 = vcmask 261120
    %v80 = vsel %vm79, %v78, 0.0
    %81 = vadd.xlane.f32.xlu0 %v80
    %v82 = vpop.xlane.xlu0 %81
    %v83 = vmax.f32 %v82, 1e-24
    %v84 = vrsqrt.pop %v83
    %v85 = vmul.f32 %v76, %v84
    %v86 = vld [vmem:[#allocation3] sm:$0xff]
    %87 = vset.pattern.permute.xlu0 0
    %88 = vperm.xlu0 %87, %v77
    %v89 = vpop.permute.xlu0 %88
    %vm90 = vcmp.eq.s32.totalorder %v86, %v89
    %v91 = vsel %vm90, %v85, 0.0
    %v92 = vsel %vm79, %v91, 0.0
    %93 = vadd.xlane.f32.xlu0 %v92
    %v94 = vpop.xlane.xlu0 %93
    %v95 = vmul.f32 %v85, 1.442695
    %v96 = vpow.pop %v95
    %v97 = vsel %vm79, %v96, 0.0
    %98 = vadd.xlane.f32.xlu0 %v97
    %v99 = vpop.xlane.xlu0 %98
    %v100 = vlog2.pop %v99
    %v101 = vmul.f32 %v100, 0.6931472
    %v102 = vmul.f32 %v101, 0.1
    %v103 = vmul.f32 %v94, 1.1
    %v104 = vsub.f32 %v102, %v103
    %v105 = vld [vmem:[#allocation2] sm:$0x1]
    %v106 = vrot.slane %v104, 4
    %v107 = vadd.f32 %v104, %v106
    %v108 = vrot.slane %v107, 2
    %v109 = vadd.f32 %v107, %v108
    %v110 = vrot.slane %v109, 1
    %v111 = vadd.f32 %v109, %v110
    %v112 = vadd.f32 %v105, %v111
    %vm113 = vcmask 0
    %114 = vst.msk [vmem:[#allocation2] sm:$0x1] %vm113, %v112
    // Predicated region
    $region14: #{tpu_custom_call.1} parent=1 // pred_check
      %p115 = pneg %p66
    $region15: #{tpu_custom_call.1} parent=1 // pred_check_branch
      %117 = sbr.rel (%p115) target = $region17
    $region16: #{tpu_custom_call.1} parent=1 // pred_region
      %v118 = vld [vmem:[#allocation2] sm:$0x1]
      %v120 = vlaneseq
      %v121 = vshrl.u32 %v120, 7
      %v122 = vsub.s32 0, %v121
      %v123 = vrot.slane %v118, %v122
      %124 = vset.pattern.permute.xlu0 0
      %125 = vperm.xlu0 %124, %v123
      %v126 = vpop.permute.xlu0 %125
      %128 = vst [vmem:[#allocation4] sm:$0xff] %v126
    $region17: #{tpu_custom_call.1} parent=1 // pred_fallthru
      _
    // Predicated region
    $region18: #{tpu_custom_call.1} parent=1 // pred_check
      _
    $region19: #{tpu_custom_call.1} parent=1 // pred_check_branch
      %130 = sbr.rel (0) target = $region21
    $region20: #{tpu_custom_call.1} parent=1 // pred_region
      %s132 = ssub.s32 128, 128
      %133 = vsyncadd [#allocation5], %s132
      %s135 = sshll.u32 [#allocation4], 4
      %s136 = int_to_ptr.vmem [resolvable:$true] %s135
      %138 = dma.vmem_to_hbm [thread:$0]  %s136, 128, %s2, [#allocation5]
    $region21: #{tpu_custom_call.1} parent=1 // pred_fallthru
      _
    // Predicated region
    $region22: #{tpu_custom_call.1} parent=1 // pred_check
      _
    $region23: #{tpu_custom_call.1} parent=1 // pred_check_branch
      %140 = sbr.rel (0) target = $region25
    $region24: #{tpu_custom_call.1} parent=1 // pred_region
      %141 = dma.done [#allocation5], 128
    $region25: #{tpu_custom_call.1} parent=1 // pred_fallthru
      _
    %142 = vsyncpa [#allocation5], 1

</llo_original>
